<compile_context>
chip_gen: v5e
topology: v5e:2x2
jax: 0.10.0
libtpu: 0.0.40
codegen_flags: <defaults>
</compile_context>

<pallas_src>
import jax
import jax.numpy as jnp
from jax.experimental import pallas as pl
from jax.experimental.pallas import tpu as pltpu


def _round_up(n, m):
    return ((n + m - 1) // m) * m


# ---------------------------------------------------------------------------
# Kernel: one GRU layer over the full sequence (grid axis 0 = time).
# ---------------------------------------------------------------------------
def _gru_layer_kernel(x_ref, h0_ref, wih_ref, whh_ref, bx_ref, bhn_ref,
                      out_ref, h_scr):
    t = pl.program_id(0)
    hp = h_scr.shape[-1]                       # padded hidden (multiple of 128)

    @pl.when(t == 0)
    def _():
        h_scr[...] = h0_ref[...].astype(jnp.float32)

    x = x_ref[0].astype(jnp.float32)           # [B, Din]
    h = h_scr[...]                             # [B, Hp] f32 carry

    # Fused projections, gate order (r, z, n): each [B, 3Hp].
    gi = jnp.dot(x, wih_ref[...], preferred_element_type=jnp.float32) + bx_ref[...]
    gh = jnp.dot(h, whh_ref[...], preferred_element_type=jnp.float32)

    r = jax.nn.sigmoid(gi[:, :hp] + gh[:, :hp])
    z = jax.nn.sigmoid(gi[:, hp:2 * hp] + gh[:, hp:2 * hp])
    n = jnp.tanh(gi[:, 2 * hp:] + r * (gh[:, 2 * hp:] + bhn_ref[...]))

    h_new = n + z * (h - n)                    # == (1 - z) * n + z * h
    h_scr[...] = h_new
    out_ref[0] = h_new.astype(out_ref.dtype)


def _gru_layer(x_seq, h0, wih_t, whh_t, bx, bhn):
    """Run one GRU layer over the whole sequence with a single pallas_call."""
    T, B, Din = x_seq.shape
    Hp = h0.shape[-1]

    return pl.pallas_call(
        _gru_layer_kernel,
        out_shape=jax.ShapeDtypeStruct((T, B, Hp), x_seq.dtype),
        grid=(T,),
        in_specs=[
            pl.BlockSpec((1, B, Din), lambda t: (t, 0, 0)),    # x_t (pipelined)
            pl.BlockSpec((B, Hp), lambda t: (0, 0)),           # h0 (resident)
            pl.BlockSpec((Din, 3 * Hp), lambda t: (0, 0)),     # packed W_ih
            pl.BlockSpec((Hp, 3 * Hp), lambda t: (0, 0)),      # packed W_hh
            pl.BlockSpec((1, 3 * Hp), lambda t: (0, 0)),       # fused biases
            pl.BlockSpec((1, Hp), lambda t: (0, 0)),           # b_hn
        ],
        out_specs=pl.BlockSpec((1, B, Hp), lambda t: (t, 0, 0)),
        scratch_shapes=[pltpu.VMEM((B, Hp), jnp.float32)],
        compiler_params=pltpu.CompilerParams(
            dimension_semantics=("arbitrary",)),
    )(x_seq, h0, wih_t, whh_t, bx, bhn)


# ---------------------------------------------------------------------------
# Wrapper-side parameter packing (done once, outside the kernel).
# ---------------------------------------------------------------------------
def _pack_layer_params(wih, whh, bih, bhh, hidden_size, hp, din_padded):
    """Pack PyTorch-layout GRU params (gate order r,z,n) into fused blocks.

    wih: [3H, Din], whh: [3H, H], bih/bhh: [3H].
    Returns wih_t [din_padded, 3Hp], whh_t [Hp, 3Hp], bx [1, 3Hp], bhn [1, Hp].
    """
    H = hidden_size
    Din = wih.shape[1]

    def pad_gate_cols(w):                      # [K, 3H] -> [K, 3Hp]
        K = w.shape[0]
        w = w.reshape(K, 3, H)
        w = jnp.pad(w, ((0, 0), (0, 0), (0, hp - H)))
        return w.reshape(K, 3 * hp)

    wih_t = pad_gate_cols(wih.T)                               # [Din, 3Hp]
    wih_t = jnp.pad(wih_t, ((0, din_padded - Din), (0, 0)))    # match x lanes
    whh_t = pad_gate_cols(whh.T)                               # [H, 3Hp]
    whh_t = jnp.pad(whh_t, ((0, hp - H), (0, 0)))              # [Hp, 3Hp]

    pad1 = lambda v: jnp.pad(v, (0, hp - H))
    bx = jnp.concatenate([
        pad1(bih[:H] + bhh[:H]),                # r: fold both biases
        pad1(bih[H:2 * H] + bhh[H:2 * H]),      # z: fold both biases
        pad1(bih[2 * H:]),                      # n: input-side bias only
    ]).reshape(1, 3 * hp)
    bhn = pad1(bhh[2 * H:]).reshape(1, hp)      # n: hidden-side bias (inside r*)
    return wih_t, whh_t, bx, bhn


def pytorch_gru_pallas(input_var, hidden, params):
    """Forward of PyTorchGru: (output, hidden) = nn.GRU(input_var, hidden).

    input_var: [T, B, input_size], hidden: [num_layers, B, hidden_size].
    params: list of (W_ih, W_hh, b_ih, b_hh) per layer (PyTorch layout).
    """
    L, _, H = hidden.shape
    Hp = _round_up(H, 128)

    x_seq = input_var
    h_finals = []
    for l in range(L):
        wih, whh, bih, bhh = params[l]
        din_padded = x_seq.shape[-1]
        wih_t, whh_t, bx, bhn = _pack_layer_params(
            wih, whh, bih, bhh, H, Hp, din_padded)
        h0 = jnp.pad(hidden[l], ((0, 0), (0, Hp - H)))          # [B, Hp]
        x_seq = _gru_layer(x_seq, h0, wih_t, whh_t, bx, bhn)    # [T, B, Hp]
        h_finals.append(x_seq[-1, :, :H])                       # final h of layer l

    output = x_seq[:, :, :H]                    # last layer, padding stripped
    hidden_out = jnp.stack(h_finals, axis=0)
    return output, hidden_out


# ---------------------------------------------------------------------------
# Synthetic parameters (PyTorch nn.GRU layout) and pure-JAX reference.
# ---------------------------------------------------------------------------
def init_params(key, input_size, hidden_size, num_layers, dtype=jnp.float32):
    bound = 1.0 / (hidden_size ** 0.5)
    params = []
    k = key
    for l in range(num_layers):
        d_in = input_size if l == 0 else hidden_size
        k, k1, k2, k3, k4 = jax.random.split(k, 5)
        wih = jax.random.uniform(k1, (3 * hidden_size, d_in), dtype, -bound, bound)
        whh = jax.random.uniform(k2, (3 * hidden_size, hidden_size), dtype, -bound, bound)
        bih = jax.random.uniform(k3, (3 * hidden_size,), dtype, -bound, bound)
        bhh = jax.random.uniform(k4, (3 * hidden_size,), dtype, -bound, bound)
        params.append((wih, whh, bih, bhh))
    return params


def _reference_gru(input_var, hidden, params):
    T = input_var.shape[0]
    L, _, H = hidden.shape
    x_seq = input_var
    h_last = []
    for l in range(L):
        wih, whh, bih, bhh = params[l]
        h = hidden[l]
        outs = []
        for t in range(T):
            gi = x_seq[t] @ wih.T + bih
            gh = h @ whh.T + bhh
            r = jax.nn.sigmoid(gi[:, :H] + gh[:, :H])
            z = jax.nn.sigmoid(gi[:, H:2 * H] + gh[:, H:2 * H])
            n = jnp.tanh(gi[:, 2 * H:] + r * gh[:, 2 * H:])
            h = (1.0 - z) * n + z * h
            outs.append(h)
        x_seq = jnp.stack(outs, axis=0)
        h_last.append(h)
    return x_seq, jnp.stack(h_last, axis=0)


if __name__ == "__main__":
    SEQ_LEN, BATCH, INPUT_SIZE, HIDDEN_SIZE, NUM_LAYERS = 8, 4, 16, 32, 2

    key = jax.random.PRNGKey(0)
    k_params, k_x, k_h = jax.random.split(key, 3)

    params = init_params(k_params, INPUT_SIZE, HIDDEN_SIZE, NUM_LAYERS)
    input_var = jax.random.normal(k_x, (SEQ_LEN, BATCH, INPUT_SIZE), jnp.float32)
    h0 = jax.random.normal(k_h, (NUM_LAYERS, BATCH, HIDDEN_SIZE), jnp.float32)

    output, hidden = pytorch_gru_pallas(input_var, h0, params)
    jax.block_until_ready((output, hidden))

    ref_out, ref_hid = _reference_gru(input_var, h0, params)
    assert output.shape == (SEQ_LEN, BATCH, HIDDEN_SIZE)
    assert hidden.shape == (NUM_LAYERS, BATCH, HIDDEN_SIZE)
    assert jnp.allclose(output, ref_out, atol=1e-4, rtol=1e-4), "output mismatch"
    assert jnp.allclose(hidden, ref_hid, atol=1e-4, rtol=1e-4), "hidden mismatch"

    print("KERNEL_OK")
</pallas_src>

<mosaic_0001>
module attributes {stable_mosaic.version = 11 : i64} {
  func.func @_gru_layer_kernel(%arg0: i32, %arg1: memref<1x4x16xf32, #tpu.memory_space<vmem>>, %arg2: memref<4x128xf32, #tpu.memory_space<vmem>>, %arg3: memref<16x384xf32, #tpu.memory_space<vmem>>, %arg4: memref<128x384xf32, #tpu.memory_space<vmem>>, %arg5: memref<1x384xf32, #tpu.memory_space<vmem>>, %arg6: memref<1x128xf32, #tpu.memory_space<vmem>>, %arg7: memref<1x4x128xf32, #tpu.memory_space<vmem>>, %arg8: memref<4x128xf32, #tpu.memory_space<vmem>>) attributes {dimension_semantics = [#tpu.dimension_semantics<arbitrary>], iteration_bounds = array<i64: 8>, scalar_prefetch = 0 : i64, scratch_operands = 1 : i64, tpu.core_type = #tpu.core_type<tc>, window_params = [{transform_indices = @transform_0, window_bounds = array<i64: 1, 4, 16>}, {pipeline_mode = #tpu.pipeline_mode<synchronous>, transform_indices = @transform_1, window_bounds = array<i64: 4, 128>}, {pipeline_mode = #tpu.pipeline_mode<synchronous>, transform_indices = @transform_2, window_bounds = array<i64: 16, 384>}, {pipeline_mode = #tpu.pipeline_mode<synchronous>, transform_indices = @transform_3, window_bounds = array<i64: 128, 384>}, {pipeline_mode = #tpu.pipeline_mode<synchronous>, transform_indices = @transform_4, window_bounds = array<i64: 1, 384>}, {pipeline_mode = #tpu.pipeline_mode<synchronous>, transform_indices = @transform_5, window_bounds = array<i64: 1, 128>}, {transform_indices = @transform_6, window_bounds = array<i64: 1, 4, 128>}]} {
    %c0_i32 = arith.constant 0 : i32
    %0 = arith.cmpi eq, %arg0, %c0_i32 : i32
    %1 = arith.extui %0 : i1 to i32
    %c0_i32_0 = arith.constant 0 : i32
    %2 = arith.cmpi ne, %1, %c0_i32_0 : i32
    scf.if %2 {
      %c0_21 = arith.constant 0 : index
      %c0_22 = arith.constant 0 : index
      %44 = vector.load %arg2[%c0_21, %c0_22] : memref<4x128xf32, #tpu.memory_space<vmem>>, vector<4x128xf32>
      %c0_23 = arith.constant 0 : index
      %c0_24 = arith.constant 0 : index
      %45 = vector.load %arg8[%c0_23, %c0_24] : memref<4x128xf32, #tpu.memory_space<vmem>>, vector<4x128xf32>
      tpu.vector_store %arg8[%c0_23, %c0_24], %44 {strides = array<i32>} : memref<4x128xf32, #tpu.memory_space<vmem>>, vector<4x128xf32>,
    } else {
    }
    %c0 = arith.constant 0 : index
    %c0_1 = arith.constant 0 : index
    %c0_2 = arith.constant 0 : index
    %3 = vector.load %arg1[%c0, %c0_1, %c0_2] : memref<1x4x16xf32, #tpu.memory_space<vmem>>, vector<1x4x16xf32>
    %4 = vector.shape_cast %3 : vector<1x4x16xf32> to vector<4x16xf32>
    %c0_3 = arith.constant 0 : index
    %c0_4 = arith.constant 0 : index
    %5 = vector.load %arg8[%c0_3, %c0_4] : memref<4x128xf32, #tpu.memory_space<vmem>>, vector<4x128xf32>
    %c0_5 = arith.constant 0 : index
    %c0_6 = arith.constant 0 : index
    %6 = vector.load %arg3[%c0_5, %c0_6] : memref<16x384xf32, #tpu.memory_space<vmem>>, vector<16x384xf32>
    %cst = arith.constant dense<0.000000e+00> : vector<4x384xf32>
    %7 = tpu.matmul %4, %6, %cst {dimension_numbers = #tpu.dot_dimension_numbers<[1], [0], [0], [1], [0, 0, 1, 1], [], []>} : vector<4x16xf32>, vector<16x384xf32>, vector<4x384xf32> -> vector<4x384xf32>
    %c0_7 = arith.constant 0 : index
    %c0_8 = arith.constant 0 : index
    %8 = vector.load %arg5[%c0_7, %c0_8] : memref<1x384xf32, #tpu.memory_space<vmem>>, vector<1x384xf32>
    %9 = vector.broadcast %8 : vector<1x384xf32> to vector<4x384xf32>
    %10 = arith.addf %7, %9 : vector<4x384xf32>
    %c0_9 = arith.constant 0 : index
    %c0_10 = arith.constant 0 : index
    %11 = vector.load %arg4[%c0_9, %c0_10] : memref<128x384xf32, #tpu.memory_space<vmem>>, vector<128x384xf32>
    %cst_11 = arith.constant dense<0.000000e+00> : vector<4x384xf32>
    %12 = tpu.matmul %5, %11, %cst_11 {dimension_numbers = #tpu.dot_dimension_numbers<[1], [0], [0], [1], [0, 0, 1, 1], [], []>} : vector<4x128xf32>, vector<128x384xf32>, vector<4x384xf32> -> vector<4x384xf32>
    %13 = vector.extract_strided_slice %10 {offsets = [0, 0], sizes = [4, 128], strides = [1, 1]} : vector<4x384xf32> to vector<4x128xf32>
    %14 = vector.extract_strided_slice %12 {offsets = [0, 0], sizes = [4, 128], strides = [1, 1]} : vector<4x384xf32> to vector<4x128xf32>
    %15 = arith.addf %13, %14 : vector<4x128xf32>
    %16 = arith.negf %15 : vector<4x128xf32>
    %17 = math.exp %16 : vector<4x128xf32>
    %cst_12 = arith.constant 1.000000e+00 : f32
    %18 = vector.broadcast %cst_12 : f32 to vector<4x128xf32>
    %19 = arith.addf %18, %17 : vector<4x128xf32>
    %20 = arith.divf %18, %19 : vector<4x128xf32>
    %21 = vector.extract_strided_slice %10 {offsets = [0, 128], sizes = [4, 128], strides = [1, 1]} : vector<4x384xf32> to vector<4x128xf32>
    %22 = vector.extract_strided_slice %12 {offsets = [0, 128], sizes = [4, 128], strides = [1, 1]} : vector<4x384xf32> to vector<4x128xf32>
    %23 = arith.addf %21, %22 : vector<4x128xf32>
    %24 = arith.negf %23 : vector<4x128xf32>
    %25 = math.exp %24 : vector<4x128xf32>
    %cst_13 = arith.constant 1.000000e+00 : f32
    %26 = vector.broadcast %cst_13 : f32 to vector<4x128xf32>
    %27 = arith.addf %26, %25 : vector<4x128xf32>
    %28 = arith.divf %26, %27 : vector<4x128xf32>
    %29 = vector.extract_strided_slice %10 {offsets = [0, 256], sizes = [4, 128], strides = [1, 1]} : vector<4x384xf32> to vector<4x128xf32>
    %30 = vector.extract_strided_slice %12 {offsets = [0, 256], sizes = [4, 128], strides = [1, 1]} : vector<4x384xf32> to vector<4x128xf32>
    %c0_14 = arith.constant 0 : index
    %c0_15 = arith.constant 0 : index
    %31 = vector.load %arg6[%c0_14, %c0_15] : memref<1x128xf32, #tpu.memory_space<vmem>>, vector<1x128xf32>
    %32 = vector.broadcast %31 : vector<1x128xf32> to vector<4x128xf32>
    %33 = arith.addf %30, %32 : vector<4x128xf32>
    %34 = arith.mulf %20, %33 : vector<4x128xf32>
    %35 = arith.addf %29, %34 : vector<4x128xf32>
    %36 = math.tanh %35 : vector<4x128xf32>
    %37 = arith.subf %5, %36 : vector<4x128xf32>
    %38 = arith.mulf %28, %37 : vector<4x128xf32>
    %39 = arith.addf %36, %38 : vector<4x128xf32>
    %c0_16 = arith.constant 0 : index
    %c0_17 = arith.constant 0 : index
    %40 = vector.load %arg8[%c0_16, %c0_17] : memref<4x128xf32, #tpu.memory_space<vmem>>, vector<4x128xf32>
    tpu.vector_store %arg8[%c0_16, %c0_17], %39 {strides = array<i32>} : memref<4x128xf32, #tpu.memory_space<vmem>>, vector<4x128xf32>,
    %c0_18 = arith.constant 0 : index
    %c0_19 = arith.constant 0 : index
    %c0_20 = arith.constant 0 : index
    %41 = vector.load %arg7[%c0_18, %c0_19, %c0_20] : memref<1x4x128xf32, #tpu.memory_space<vmem>>, vector<1x4x128xf32>
    %42 = vector.shape_cast %41 : vector<1x4x128xf32> to vector<4x128xf32>
    %43 = vector.shape_cast %39 : vector<4x128xf32> to vector<1x4x128xf32>
    tpu.vector_store %arg7[%c0_18, %c0_19, %c0_20], %43 {strides = array<i32>} : memref<1x4x128xf32, #tpu.memory_space<vmem>>, vector<1x4x128xf32>,
    return
  }
  func.func @transform_0(%arg0: i32) -> (i32, i32, i32) {
    %c0_i32 = arith.constant 0 : i32
    %c0_i32_0 = arith.constant 0 : i32
    %c0_i32_1 = arith.constant 0 : i32
    return %arg0, %c0_i32, %c0_i32_0 : i32, i32, i32
  }
  func.func @transform_1(%arg0: i32) -> (i32, i32) {
    %c0_i32 = arith.constant 0 : i32
    %c0_i32_0 = arith.constant 0 : i32
    %c0_i32_1 = arith.constant 0 : i32
    return %c0_i32, %c0_i32_0 : i32, i32
  }
  func.func @transform_2(%arg0: i32) -> (i32, i32) {
    %c0_i32 = arith.constant 0 : i32
    %c0_i32_0 = arith.constant 0 : i32
    %c0_i32_1 = arith.constant 0 : i32
    return %c0_i32, %c0_i32_0 : i32, i32
  }
  func.func @transform_3(%arg0: i32) -> (i32, i32) {
    %c0_i32 = arith.constant 0 : i32
    %c0_i32_0 = arith.constant 0 : i32
    %c0_i32_1 = arith.constant 0 : i32
    return %c0_i32, %c0_i32_0 : i32, i32
  }
  func.func @transform_4(%arg0: i32) -> (i32, i32) {
    %c0_i32 = arith.constant 0 : i32
    %c0_i32_0 = arith.constant 0 : i32
    %c0_i32_1 = arith.constant 0 : i32
    return %c0_i32, %c0_i32_0 : i32, i32
  }
  func.func @transform_5(%arg0: i32) -> (i32, i32) {
    %c0_i32 = arith.constant 0 : i32
    %c0_i32_0 = arith.constant 0 : i32
    %c0_i32_1 = arith.constant 0 : i32
    return %c0_i32, %c0_i32_0 : i32, i32
  }
  func.func @transform_6(%arg0: i32) -> (i32, i32, i32) {
    %c0_i32 = arith.constant 0 : i32
    %c0_i32_0 = arith.constant 0 : i32
    %c0_i32_1 = arith.constant 0 : i32
    return %arg0, %c0_i32, %c0_i32_0 : i32, i32, i32
  }
}

</mosaic_0001>

<llo_original>
// kernel: tpu_custom_call.1
$region0: #{tpu_custom_call.1}
  #allocation0 [shape = 'u32[]', space=smem, size = 0x4, offset = 0x4, fixed_abs, tag = 'smem constant byte address 0x4 - core index']
  #allocation1 [shape = 'u32[72,128]{1,0:T(1,128)}', space=vmem, size = 0x9000, scoped, tag = 'internal scratch']
  #allocation2 [shape = 'f32[4,128]{1,0:T(4,128)}', space=vmem, size = 0x800, scoped, tag = 'scratch operand']
  %s0 = inlined_call_operand.hbm [shape: f32[8,4,16], index: 0, kind: input, shape index: {}]
  %s1 = inlined_call_operand.hbm [shape: f32[4,128], index: 1, kind: input, shape index: {}]
  %s2 = inlined_call_operand.hbm [shape: f32[16,384], index: 2, kind: input, shape index: {}]
  %s3 = inlined_call_operand.hbm [shape: f32[128,384], index: 3, kind: input, shape index: {}]
  %s4 = inlined_call_operand.vmem [shape: f32[1,384], index: 4, kind: input, shape index: {}]
  %s5 = inlined_call_operand.vmem [shape: f32[1,128], index: 5, kind: input, shape index: {}]
  %s6 = inlined_call_operand.hbm [shape: f32[8,4,128], index: 6, kind: output, shape index: {}]
  %s7 = sld [smem:[#allocation0]]
  $region77: #{tpu_custom_call.1} parent=0
    _
  %s9 = ssub.s32 1, %s7
  %s10 = scalar_select 0, %s9, %s7
  $region1: #{tpu_custom_call.1} parent=0
    #allocation3 [shape = 'u8[4096]{0}', space=vmem, size = 0x1000, scoped, tag = 'input window, operand 0']
    #allocation4 [shape = 's32[2]{0}', space=sflag, size = 0x8, scoped, tag = 'scoped memory for tpu_custom_call.1']
    #allocation5 [shape = 's32[2]{0}', space=sflag, size = 0x8, scoped, tag = 'scoped memory for tpu_custom_call.1']
    #allocation6 [shape = 'u8[2048]{0}', space=vmem, size = 0x800, scoped, tag = 'input window, operand 1, single buffered']
    #allocation7 [shape = 's32[1]{0}', space=sflag, size = 0x4, scoped, tag = 'scoped memory for tpu_custom_call.1']
    #allocation8 [shape = 'u8[24576]{0}', space=vmem, size = 0x6000, scoped, tag = 'input window, operand 2, single buffered']
    #allocation9 [shape = 'u8[196608]{0}', space=vmem, size = 0x30000, scoped, tag = 'input window, operand 3, single buffered']
    #allocation10 [shape = 's32[1]{0}', space=sflag, size = 0x4, scoped, tag = 'scoped memory for tpu_custom_call.1']
    #allocation11 [shape = 'u8[4096]{0}', space=vmem, size = 0x1000, scoped, tag = 'output window, operand 0']
    %11 = vsyncpa [#allocation4], 0
    %s12 = scalar_lea.sflag [#allocation4], 1
    %13 = vsyncpa %s12, 0
    %14 = vsyncpa [#allocation7], 0
    %15 = vsyncpa [#allocation10], 0
    %16 = vsyncpa [#allocation5], 0
    %s17 = scalar_lea.sflag [#allocation5], 1
    %18 = vsyncpa %s17, 0
    loop: start=0, step=1, limit=10
    $region2: #{tpu_custom_call.1} parent=1 // loop_pre_header
      _
    $region3: #{tpu_custom_call.1} parent=1 // loop_header
      %s20 = sphi 0, %s24
      %p21 = scmp.ge.s32.totalorder %s20, 10
      %s30 = sphi 0, %s32
      %s33 = sphi 0, %s30
      %s34 = sphi 0, %s33
      %s50 = sphi 0, %s34
      %s54 = sphi 0, %s54
      %s56 = sphi 0, %s54
      %s57 = sphi 0, %s56
      %s71 = sphi 0, %s57
      %s75 = sphi 0, %s75
      %s77 = sphi 0, %s75
      %s78 = sphi 0, %s77
      %s92 = sphi 0, %s78
      %s96 = sphi 0, %s96
      %s98 = sphi 0, %s96
      %s99 = sphi 0, %s98
      %s113 = sphi 0, %s99
      %s117 = sphi 0, %s117
      %s119 = sphi 0, %s117
      %s120 = sphi 0, %s119
      %s134 = sphi 0, %s120
      %s138 = sphi 0, %s138
      %s140 = sphi 0, %s138
      %s141 = sphi 0, %s140
      %s155 = sphi 0, %s141
      %s161 = sphi 0, %s163
      %s164 = sphi 0, %s161
      %s165 = sphi 0, %s164
      %s181 = sphi 0, %s165
    $region4: #{tpu_custom_call.1} parent=1 // loop_header_branch
      %23 = sbr.rel (%p21) target = $region8
    $region5: #{tpu_custom_call.1} parent=1 // loop_body
      %s25 = ssub.s32 %s20, 1
      %s26 = ssub.s32 %s20, 2
      %s27 = sadd.s32 %s20, 1
      %s28 = ssub.s32 %s20, %s27
      %p29 = scmp.eq.s32.totalorder %s28, 0
      %s31 = sadd.s32 %s30, 1
      %s32 = scalar_select %p29, %s30, %s31
      %p35 = pneg %p29
      %p36 = scmp.eq.s32.totalorder %s20, 7
      %p37 = por %p35, %p36
      %p38 = scmp.ne.s32.totalorder %s30, %s33
      %p39 = scmp.eq.s32.totalorder %s20, 0
      %p40 = por %p38, %p39
      %p41 = scmp.ne.s32.totalorder %s30, %s33
      %p42 = scmp.eq.s32.totalorder %s25, 7
      %p43 = por %p41, %p42
      %p44 = scmp.ne.s32.totalorder %s33, %s34
      %p45 = scmp.eq.s32.totalorder %s25, 0
      %p46 = por %p44, %p45
      %p47 = scmp.ne.s32.totalorder %s33, %s34
      %p48 = scmp.eq.s32.totalorder %s26, 7
      %p49 = por %p47, %p48
      %p51 = scmp.ne.s32.totalorder %s34, %s50
      %p52 = scmp.eq.s32.totalorder %s26, 0
      %p53 = por %p51, %p52
      %s55 = sadd.s32 %s54, 1
      %p58 = scmp.eq.s32.totalorder %s20, 7
      %p59 = scmp.ne.s32.totalorder %s54, %s56
      %p60 = scmp.eq.s32.totalorder %s20, 0
      %p61 = por %p59, %p60
      %p62 = scmp.ne.s32.totalorder %s54, %s56
      %p63 = scmp.eq.s32.totalorder %s25, 7
      %p64 = por %p62, %p63
      %p65 = scmp.ne.s32.totalorder %s56, %s57
      %p66 = scmp.eq.s32.totalorder %s25, 0
      %p67 = por %p65, %p66
      %p68 = scmp.ne.s32.totalorder %s56, %s57
      %p69 = scmp.eq.s32.totalorder %s26, 7
      %p70 = por %p68, %p69
      %p72 = scmp.ne.s32.totalorder %s57, %s71
      %p73 = scmp.eq.s32.totalorder %s26, 0
      %p74 = por %p72, %p73
      %s76 = sadd.s32 %s75, 1
      %p79 = scmp.eq.s32.totalorder %s20, 7
      %p80 = scmp.ne.s32.totalorder %s75, %s77
      %p81 = scmp.eq.s32.totalorder %s20, 0
      %p82 = por %p80, %p81
      %p83 = scmp.ne.s32.totalorder %s75, %s77
      %p84 = scmp.eq.s32.totalorder %s25, 7
      %p85 = por %p83, %p84
      %p86 = scmp.ne.s32.totalorder %s77, %s78
      %p87 = scmp.eq.s32.totalorder %s25, 0
      %p88 = por %p86, %p87
      %p89 = scmp.ne.s32.totalorder %s77, %s78
      %p90 = scmp.eq.s32.totalorder %s26, 7
      %p91 = por %p89, %p90
      %p93 = scmp.ne.s32.totalorder %s78, %s92
      %p94 = scmp.eq.s32.totalorder %s26, 0
      %p95 = por %p93, %p94
      %s97 = sadd.s32 %s96, 1
      %p100 = scmp.eq.s32.totalorder %s20, 7
      %p101 = scmp.ne.s32.totalorder %s96, %s98
      %p102 = scmp.eq.s32.totalorder %s20, 0
      %p103 = por %p101, %p102
      %p104 = scmp.ne.s32.totalorder %s96, %s98
      %p105 = scmp.eq.s32.totalorder %s25, 7
      %p106 = por %p104, %p105
      %p107 = scmp.ne.s32.totalorder %s98, %s99
      %p108 = scmp.eq.s32.totalorder %s25, 0
      %p109 = por %p107, %p108
      %p110 = scmp.ne.s32.totalorder %s98, %s99
      %p111 = scmp.eq.s32.totalorder %s26, 7
      %p112 = por %p110, %p111
      %p114 = scmp.ne.s32.totalorder %s99, %s113
      %p115 = scmp.eq.s32.totalorder %s26, 0
      %p116 = por %p114, %p115
      %s118 = sadd.s32 %s117, 1
      %p121 = scmp.eq.s32.totalorder %s20, 7
      %p122 = scmp.ne.s32.totalorder %s117, %s119
      %p123 = scmp.eq.s32.totalorder %s20, 0
      %p124 = por %p122, %p123
      %p125 = scmp.ne.s32.totalorder %s117, %s119
      %p126 = scmp.eq.s32.totalorder %s25, 7
      %p127 = por %p125, %p126
      %p128 = scmp.ne.s32.totalorder %s119, %s120
      %p129 = scmp.eq.s32.totalorder %s25, 0
      %p130 = por %p128, %p129
      %p131 = scmp.ne.s32.totalorder %s119, %s120
      %p132 = scmp.eq.s32.totalorder %s26, 7
      %p133 = por %p131, %p132
      %p135 = scmp.ne.s32.totalorder %s120, %s134
      %p136 = scmp.eq.s32.totalorder %s26, 0
      %p137 = por %p135, %p136
      %s139 = sadd.s32 %s138, 1
      %p142 = scmp.eq.s32.totalorder %s20, 7
      %p143 = scmp.ne.s32.totalorder %s138, %s140
      %p144 = scmp.eq.s32.totalorder %s20, 0
      %p145 = por %p143, %p144
      %p146 = scmp.ne.s32.totalorder %s138, %s140
      %p147 = scmp.eq.s32.totalorder %s25, 7
      %p148 = por %p146, %p147
      %p149 = scmp.ne.s32.totalorder %s140, %s141
      %p150 = scmp.eq.s32.totalorder %s25, 0
      %p151 = por %p149, %p150
      %p152 = scmp.ne.s32.totalorder %s140, %s141
      %p153 = scmp.eq.s32.totalorder %s26, 7
      %p154 = por %p152, %p153
      %p156 = scmp.ne.s32.totalorder %s141, %s155
      %p157 = scmp.eq.s32.totalorder %s26, 0
      %p158 = por %p156, %p157
      %s159 = ssub.s32 %s20, %s27
      %p160 = scmp.eq.s32.totalorder %s159, 0
      %s162 = sadd.s32 %s161, 1
      %s163 = scalar_select %p160, %s161, %s162
      %p166 = pneg %p160
      %p167 = scmp.eq.s32.totalorder %s20, 7
      %p168 = por %p166, %p167
      %p169 = scmp.ne.s32.totalorder %s161, %s164
      %p170 = scmp.eq.s32.totalorder %s20, 0
      %p171 = por %p169, %p170
      %p172 = scmp.ne.s32.totalorder %s161, %s164
      %p173 = scmp.eq.s32.totalorder %s25, 7
      %p174 = por %p172, %p173
      %p175 = scmp.ne.s32.totalorder %s164, %s165
      %p176 = scmp.eq.s32.totalorder %s25, 0
      %p177 = por %p175, %p176
      %p178 = scmp.ne.s32.totalorder %s164, %s165
      %p179 = scmp.eq.s32.totalorder %s26, 7
      %p180 = por %p178, %p179
      %p182 = scmp.ne.s32.totalorder %s165, %s181
      %p183 = scmp.eq.s32.totalorder %s26, 0
      %p184 = por %p182, %p183
      %p185 = scmp.le.s32.totalorder 1, %s20
      %p186 = scmp.lt.s32.totalorder %s20, 9
      %p187 = pnand %p185, %p186
      %p188 = pneg %p187
      // Predicated region
      $region9: #{tpu_custom_call.1} parent=5 // pred_check
        _
      $region10: #{tpu_custom_call.1} parent=5 // pred_check_branch
        %190 = sbr.rel (%p187) target = $region12
      $region11: #{tpu_custom_call.1} parent=5 // pred_region
        %s191 = ssub.s32 %s20, 1
        // Predicated region
        $region13: #{tpu_custom_call.1} parent=11 // pred_check
          %p192 = pneg %p67
        $region14: #{tpu_custom_call.1} parent=11 // pred_check_branch
          %194 = sbr.rel (%p192) target = $region16
        $region15: #{tpu_custom_call.1} parent=11 // pred_region
          %196 = vsyncadd [#allocation7], 0
          %s198 = sshll.u32 %s1, 4
          %s199 = int_to_ptr.hbm [resolvable:$true] %s198
          %s200 = sshll.u32 [#allocation6], 4
          %s201 = int_to_ptr.vmem [resolvable:$true] %s200
          %203 = dma.hbm_to_vmem [thread:$0]  %s199, 64, %s201, [#allocation7]
        $region16: #{tpu_custom_call.1} parent=11 // pred_fallthru
          _
        // Predicated region
        $region17: #{tpu_custom_call.1} parent=11 // pred_check
          %p204 = pneg %p88
        $region18: #{tpu_custom_call.1} parent=11 // pred_check_branch
          %206 = sbr.rel (%p204) target = $region20
        $region19: #{tpu_custom_call.1} parent=11 // pred_region
          %208 = vsyncadd [#allocation7], 0
          %s209 = sshll.u32 %s2, 4
          %s210 = int_to_ptr.hbm [resolvable:$true] %s209
          %s211 = sshll.u32 [#allocation8], 4
          %s212 = int_to_ptr.vmem [resolvable:$true] %s211
          %217 = dma.hbm_to_vmem [thread:$0]  %s210, 768, %s212, [#allocation7], 384, 384, 24
        $region20: #{tpu_custom_call.1} parent=11 // pred_fallthru
          _
        // Predicated region
        $region21: #{tpu_custom_call.1} parent=11 // pred_check
          %p218 = pneg %p109
        $region22: #{tpu_custom_call.1} parent=11 // pred_check_branch
          %220 = sbr.rel (%p218) target = $region24
        $region23: #{tpu_custom_call.1} parent=11 // pred_region
          %222 = vsyncadd [#allocation10], 0
          %s223 = sshll.u32 %s3, 4
          %s224 = int_to_ptr.hbm [resolvable:$true] %s223
          %s225 = sshll.u32 [#allocation9], 4
          %s226 = int_to_ptr.vmem [resolvable:$true] %s225
          %231 = dma.hbm_to_vmem [thread:$0]  %s224, 6144, %s226, [#allocation10], 384, 384, 24
        $region24: #{tpu_custom_call.1} parent=11 // pred_fallthru
          _
        // Predicated region
        $region25: #{tpu_custom_call.1} parent=11 // pred_check
          %p232 = pneg %p130
        $region26: #{tpu_custom_call.1} parent=11 // pred_check_branch
          %234 = sbr.rel (%p232) target = $region28
        $region27: #{tpu_custom_call.1} parent=11 // pred_region
          _
        $region28: #{tpu_custom_call.1} parent=11 // pred_fallthru
          _
        // Predicated region
        $region29: #{tpu_custom_call.1} parent=11 // pred_check
          %p235 = pneg %p151
        $region30: #{tpu_custom_call.1} parent=11 // pred_check_branch
          %237 = sbr.rel (%p235) target = $region32
        $region31: #{tpu_custom_call.1} parent=11 // pred_region
          _
        $region32: #{tpu_custom_call.1} parent=11 // pred_fallthru
          _
      $region12: #{tpu_custom_call.1} parent=5 // pred_fallthru
        _
      %p238 = scmp.lt.s32.totalorder %s20, 8
      // Predicated region
      $region33: #{tpu_custom_call.1} parent=5 // pred_check
        %p239 = pneg %p238
      $region34: #{tpu_custom_call.1} parent=5 // pred_check_branch
        %241 = sbr.rel (%p239) target = $region36
      $region35: #{tpu_custom_call.1} parent=5 // pred_region
        // Predicated region
        $region37: #{tpu_custom_call.1} parent=35 // pred_check
          %p242 = pneg %p40
        $region38: #{tpu_custom_call.1} parent=35 // pred_check_branch
          %244 = sbr.rel (%p242) target = $region40
        $region39: #{tpu_custom_call.1} parent=35 // pred_region
          %s245 = sand.u32 %s30, 1
          %s246 = scalar_lea.sflag [#allocation4], %s245
          %s247 = sand.u32 %s30, 1
          %s248 = smul.addr %s247, 4
          %s249 = scalar_lea.vmem [#allocation3], %s248
          %251 = vsyncadd %s246, 0
          %s252 = smul.addr %s20, 4
          %s253 = scalar_lea.hbm %s0, %s252
          %s255 = sshll.u32 %s253, 4
          %s256 = int_to_ptr.hbm [resolvable:$true] %s255
          %s257 = sshll.u32 %s249, 4
          %s258 = int_to_ptr.vmem [resolvable:$true] %s257
          %260 = dma.hbm_to_vmem [thread:$0]  %s256, 64, %s258, %s246
        $region40: #{tpu_custom_call.1} parent=35 // pred_fallthru
          _
      $region36: #{tpu_custom_call.1} parent=5 // pred_fallthru
        _
      %p261 = scmp.le.s32.totalorder 1, %s20
      %p262 = scmp.lt.s32.totalorder %s20, 9
      %p263 = pnand %p261, %p262
      %p264 = pneg %p263
      // Predicated region
      $region41: #{tpu_custom_call.1} parent=5 // pred_check
        _
      $region42: #{tpu_custom_call.1} parent=5 // pred_check_branch
        %266 = sbr.rel (%p263) target = $region44
      $region43: #{tpu_custom_call.1} parent=5 // pred_region
        %s267 = ssub.s32 %s20, 1
        %s268 = sand.u32 %s33, 1
        %s269 = scalar_lea.sflag [#allocation4], %s268
        %s270 = sand.u32 %s33, 1
        %s271 = smul.addr %s270, 4
        %s272 = scalar_lea.vmem [#allocation3], %s271
        // Predicated region
        $region45: #{tpu_custom_call.1} parent=43 // pred_check
          %p273 = pneg %p46
        $region46: #{tpu_custom_call.1} parent=43 // pred_check_branch
          %275 = sbr.rel (%p273) target = $region48
        $region47: #{tpu_custom_call.1} parent=43 // pred_region
          %277 = dma.done %s269, 64
        $region48: #{tpu_custom_call.1} parent=43 // pred_fallthru
          _
        // Predicated region
        $region49: #{tpu_custom_call.1} parent=43 // pred_check
          %p278 = pneg %p67
        $region50: #{tpu_custom_call.1} parent=43 // pred_check_branch
          %280 = sbr.rel (%p278) target = $region52
        $region51: #{tpu_custom_call.1} parent=43 // pred_region
          %282 = dma.done [#allocation7], 64
        $region52: #{tpu_custom_call.1} parent=43 // pred_fallthru
          _
        // Predicated region
        $region53: #{tpu_custom_call.1} parent=43 // pred_check
          %p283 = pneg %p88
        $region54: #{tpu_custom_call.1} parent=43 // pred_check_branch
          %285 = sbr.rel (%p283) target = $region56
        $region55: #{tpu_custom_call.1} parent=43 // pred_region
          %287 = dma.done [#allocation7], 768
        $region56: #{tpu_custom_call.1} parent=43 // pred_fallthru
          _
        // Predicated region
        $region57: #{tpu_custom_call.1} parent=43 // pred_check
          %p288 = pneg %p109
        $region58: #{tpu_custom_call.1} parent=43 // pred_check_branch
          %290 = sbr.rel (%p288) target = $region60
        $region59: #{tpu_custom_call.1} parent=43 // pred_region
          %292 = dma.done [#allocation10], 6144
        $region60: #{tpu_custom_call.1} parent=43 // pred_fallthru
          _
        %s293 = sand.u32 %s33, 1
        %s294 = scalar_lea.sflag [#allocation4], %s293
        %s295 = sand.u32 %s33, 1
        %s296 = smul.addr %s295, 4
        %s297 = scalar_lea.vmem [#allocation3], %s296
        %p298 = pneg %p46
        %p299 = pneg %p43
        %p300 = pneg %p67
        %p301 = pneg %p64
        %p302 = pneg %p88
        %p303 = pneg %p85
        %p304 = pneg %p109
        %p305 = pneg %p106
        %p306 = pneg %p130
        %p307 = pneg %p127
        %p308 = pneg %p151
        %p309 = pneg %p148
        %p310 = pneg %p177
        %p311 = pneg %p174
        %s312 = sand.u32 %s164, 1
        %s313 = scalar_lea.sflag [#allocation5], %s312
        %s314 = sand.u32 %s164, 1
        %s315 = smul.addr %s314, 4
        %s316 = scalar_lea.vmem [#allocation11], %s315
        %p317 = scmp.eq.s32.totalorder %s25, 0
        // Predicated region
        $region61: #{tpu_custom_call.1} parent=43 // pred_check
          %p318 = pneg %p317
        $region62: #{tpu_custom_call.1} parent=43 // pred_check_branch
          %320 = sbr.rel (%p318) target = $region64
        $region63: #{tpu_custom_call.1} parent=43 // pred_region
          %v321 = vld [vmem:[#allocation6] sm:$0xf]
          %322 = vst [vmem:[#allocation2] sm:$0xf] %v321
        $region64: #{tpu_custom_call.1} parent=43 // pred_fallthru
          _
        %v323 = vld [vmem:[%s272] sm:$0xf]
        %v324 = vld [vmem:[#allocation2] sm:$0xf]
        %v325 = vld [vmem:[#allocation8] sm:$0xff]
        %v326 = vld [vmem:[#allocation8 + $0x8] sm:$0xff]
        %v327 = vld [vmem:[#allocation8 + $0x10] sm:$0xff]
        %v328 = vld [vmem:[#allocation8 + $0x18] sm:$0xff]
        %v329 = vld [vmem:[#allocation8 + $0x20] sm:$0xff]
        %v330 = vld [vmem:[#allocation8 + $0x28] sm:$0xff]
        %v331 = vld [vmem:[%s4] sm:$0x7]
        %v333 = vperm.slane %v331, 0
        %v334 = vperm.slane %v331, 1
        %v335 = vperm.slane %v331, 2
        %vm339 = vcmask 130048
        %v341 = vsel %vm339, %v323, 0
        %343 = vmatpush.msra.mxu0 0.0
        %344 = vmatpush.msra.mxu0 0.0
        %345 = vmatpush.msra.mxu0 0.0
        %346 = vmatpush.msra.mxu0 0.0
        %347 = vmatpush.msra.mxu0 0.0
        %348 = vmatpush.msra.mxu0 0.0
        %349 = vmatpush.msra.mxu0 0.0
        %350 = vmatpush.msra.mxu0 0.0
        %351 = vmatpush.msra.mxu0 0.0
        %352 = vmatpush.msra.mxu0 0.0
        %353 = vmatpush.msra.mxu0 0.0
        %354 = vmatpush.msra.mxu0 0.0
        %355 = vmatpush.msra.mxu0 0.0
        %356 = vmatpush.msra.mxu0 0.0
        %357 = vmatpush.msra.mxu0 %v328
        %358 = vmatpush.msra.mxu0 %v325
        %359 = vmatmul.f32.gmra.mxu0 %v341
        %v360 = vpop.f32.mrf.mxu0
        %v361 = vadd.f32 %v333, %v360
        %362 = vdwg.mxu0
        %363 = vmatpush.msra.mxu0 0.0
        %364 = vmatpush.msra.mxu0 0.0
        %365 = vmatpush.msra.mxu0 0.0
        %366 = vmatpush.msra.mxu0 0.0
        %367 = vmatpush.msra.mxu0 0.0
        %368 = vmatpush.msra.mxu0 0.0
        %369 = vmatpush.msra.mxu0 0.0
        %370 = vmatpush.msra.mxu0 0.0
        %371 = vmatpush.msra.mxu0 0.0
        %372 = vmatpush.msra.mxu0 0.0
        %373 = vmatpush.msra.mxu0 0.0
        %374 = vmatpush.msra.mxu0 0.0
        %375 = vmatpush.msra.mxu0 0.0
        %376 = vmatpush.msra.mxu0 0.0
        %377 = vmatpush.msra.mxu0 %v329
        %378 = vmatpush.msra.mxu0 %v326
        %379 = vmatmul.f32.gmra.mxu0 %v341
        %v380 = vpop.f32.mrf.mxu0
        %v381 = vadd.f32 %v334, %v380
        %382 = vdwg.mxu0
        %383 = vmatpush.msra.mxu0 0.0
        %384 = vmatpush.msra.mxu0 0.0
        %385 = vmatpush.msra.mxu0 0.0
        %386 = vmatpush.msra.mxu0 0.0
        %387 = vmatpush.msra.mxu0 0.0
        %388 = vmatpush.msra.mxu0 0.0
        %389 = vmatpush.msra.mxu0 0.0
        %390 = vmatpush.msra.mxu0 0.0
        %391 = vmatpush.msra.mxu0 0.0
        %392 = vmatpush.msra.mxu0 0.0
        %393 = vmatpush.msra.mxu0 0.0
        %394 = vmatpush.msra.mxu0 0.0
        %395 = vmatpush.msra.mxu0 0.0
        %396 = vmatpush.msra.mxu0 0.0
        %397 = vmatpush.msra.mxu0 %v330
        %398 = vmatpush.msra.mxu0 %v327
        %399 = vmatmul.f32.gmra.mxu0 %v341
        %v400 = vpop.f32.mrf.mxu0
        %v401 = vadd.f32 %v335, %v400
        %402 = vdwg.mxu0
        %v403 = vld [vmem:[#allocation9] sm:$0xff]
        %v404 = vld [vmem:[#allocation9 + $0x8] sm:$0xff]
        %v405 = vld [vmem:[#allocation9 + $0x10] sm:$0xff]
        %v406 = vld [vmem:[#allocation9 + $0x18] sm:$0xff]
        %v407 = vld [vmem:[#allocation9 + $0x20] sm:$0xff]
        %v408 = vld [vmem:[#allocation9 + $0x28] sm:$0xff]
        %v409 = vld [vmem:[#allocation9 + $0x30] sm:$0xff]
        %v410 = vld [vmem:[#allocation9 + $0x38] sm:$0xff]
        %v411 = vld [vmem:[#allocation9 + $0x40] sm:$0xff]
        %v412 = vld [vmem:[#allocation9 + $0x48] sm:$0xff]
        %v413 = vld [vmem:[#allocation9 + $0x50] sm:$0xff]
        %v414 = vld [vmem:[#allocation9 + $0x58] sm:$0xff]
        %v415 = vld [vmem:[#allocation9 + $0x60] sm:$0xff]
        %v416 = vld [vmem:[#allocation9 + $0x68] sm:$0xff]
        %v417 = vld [vmem:[#allocation9 + $0x70] sm:$0xff]
        %v418 = vld [vmem:[#allocation9 + $0x78] sm:$0xff]
        %v419 = vld [vmem:[#allocation9 + $0x80] sm:$0xff]
        %v420 = vld [vmem:[#allocation9 + $0x88] sm:$0xff]
        %v421 = vld [vmem:[#allocation9 + $0x90] sm:$0xff]
        %v422 = vld [vmem:[#allocation9 + $0x98] sm:$0xff]
        %v423 = vld [vmem:[#allocation9 + $0xa0] sm:$0xff]
        %v424 = vld [vmem:[#allocation9 + $0xa8] sm:$0xff]
        %v425 = vld [vmem:[#allocation9 + $0xb0] sm:$0xff]
        %v426 = vld [vmem:[#allocation9 + $0xb8] sm:$0xff]
        %v427 = vld [vmem:[#allocation9 + $0xc0] sm:$0xff]
        %v428 = vld [vmem:[#allocation9 + $0xc8] sm:$0xff]
        %v429 = vld [vmem:[#allocation9 + $0xd0] sm:$0xff]
        %v430 = vld [vmem:[#allocation9 + $0xd8] sm:$0xff]
        %v431 = vld [vmem:[#allocation9 + $0xe0] sm:$0xff]
        %v432 = vld [vmem:[#allocation9 + $0xe8] sm:$0xff]
        %v433 = vld [vmem:[#allocation9 + $0xf0] sm:$0xff]
        %v434 = vld [vmem:[#allocation9 + $0xf8] sm:$0xff]
        %v435 = vld [vmem:[#allocation9 + $0x100] sm:$0xff]
        %v436 = vld [vmem:[#allocation9 + $0x108] sm:$0xff]
        %v437 = vld [vmem:[#allocation9 + $0x110] sm:$0xff]
        %v438 = vld [vmem:[#allocation9 + $0x118] sm:$0xff]
        %v439 = vld [vmem:[#allocation9 + $0x120] sm:$0xff]
        %v440 = vld [vmem:[#allocation9 + $0x128] sm:$0xff]
        %v441 = vld [vmem:[#allocation9 + $0x130] sm:$0xff]
        %v442 = vld [vmem:[#allocation9 + $0x138] sm:$0xff]
        %v443 = vld [vmem:[#allocation9 + $0x140] sm:$0xff]
        %v444 = vld [vmem:[#allocation9 + $0x148] sm:$0xff]
        %v445 = vld [vmem:[#allocation9 + $0x150] sm:$0xff]
        %v446 = vld [vmem:[#allocation9 + $0x158] sm:$0xff]
        %v447 = vld [vmem:[#allocation9 + $0x160] sm:$0xff]
        %v448 = vld [vmem:[#allocation9 + $0x168] sm:$0xff]
        %v449 = vld [vmem:[#allocation9 + $0x170] sm:$0xff]
        %v450 = vld [vmem:[#allocation9 + $0x178] sm:$0xff]
        %451 = vmatpush.msra.mxu0 %v448
        %452 = vmatpush.msra.mxu0 %v445
        %453 = vmatpush.msra.mxu0 %v442
        %454 = vmatpush.msra.mxu0 %v439
        %455 = vmatpush.msra.mxu0 %v436
        %456 = vmatpush.msra.mxu0 %v433
        %457 = vmatpush.msra.mxu0 %v430
        %458 = vmatpush.msra.mxu0 %v427
        %459 = vmatpush.msra.mxu0 %v424
        %460 = vmatpush.msra.mxu0 %v421
        %461 = vmatpush.msra.mxu0 %v418
        %462 = vmatpush.msra.mxu0 %v415
        %463 = vmatpush.msra.mxu0 %v412
        %464 = vmatpush.msra.mxu0 %v409
        %465 = vmatpush.msra.mxu0 %v406
        %466 = vmatpush.msra.mxu0 %v403
        %467 = vmatmul.f32.gmra.mxu0 %v324
        %v468 = vpop.f32.mrf.mxu0
        %v469 = vadd.f32 0.0, %v468
        %470 = vdwg.mxu0
        %471 = vmatpush.msra.mxu0 %v449
        %472 = vmatpush.msra.mxu0 %v446
        %473 = vmatpush.msra.mxu0 %v443
        %474 = vmatpush.msra.mxu0 %v440
        %475 = vmatpush.msra.mxu0 %v437
        %476 = vmatpush.msra.mxu0 %v434
        %477 = vmatpush.msra.mxu0 %v431
        %478 = vmatpush.msra.mxu0 %v428
        %479 = vmatpush.msra.mxu0 %v425
        %480 = vmatpush.msra.mxu0 %v422
        %481 = vmatpush.msra.mxu0 %v419
        %482 = vmatpush.msra.mxu0 %v416
        %483 = vmatpush.msra.mxu0 %v413
        %484 = vmatpush.msra.mxu0 %v410
        %485 = vmatpush.msra.mxu0 %v407
        %486 = vmatpush.msra.mxu0 %v404
        %487 = vmatmul.f32.gmra.mxu0 %v324
        %v488 = vpop.f32.mrf.mxu0
        %v489 = vadd.f32 0.0, %v488
        %490 = vdwg.mxu0
        %491 = vmatpush.msra.mxu0 %v450
        %492 = vmatpush.msra.mxu0 %v447
        %493 = vmatpush.msra.mxu0 %v444
        %494 = vmatpush.msra.mxu0 %v441
        %495 = vmatpush.msra.mxu0 %v438
        %496 = vmatpush.msra.mxu0 %v435
        %497 = vmatpush.msra.mxu0 %v432
        %498 = vmatpush.msra.mxu0 %v429
        %499 = vmatpush.msra.mxu0 %v426
        %500 = vmatpush.msra.mxu0 %v423
        %501 = vmatpush.msra.mxu0 %v420
        %502 = vmatpush.msra.mxu0 %v417
        %503 = vmatpush.msra.mxu0 %v414
        %504 = vmatpush.msra.mxu0 %v411
        %505 = vmatpush.msra.mxu0 %v408
        %506 = vmatpush.msra.mxu0 %v405
        %507 = vmatmul.f32.gmra.mxu0 %v324
        %v508 = vpop.f32.mrf.mxu0
        %v509 = vadd.f32 0.0, %v508
        %510 = vdwg.mxu0
        %v511 = vadd.f32 %v361, %v469
        %v512 = vxor.u32 %v511, 2147483648
        %v513 = vmul.f32 %v512, 1.442695
        %v514 = vpow.pop %v513
        %v515 = vadd.f32 %v514, 1.0
        %v516 = vrcp.pop %v515
        %v517 = vmul.f32 %v515, %v516
        %v518 = vsub.f32 1.0, %v517
        %v519 = vmul.f32 %v516, %v518
        %v520 = vadd.f32 %v516, %v519
        %vm521 = vweird.f32 %v515
        %vm522 = vweird.f32 %v516
        %vm523 = vmor %vm521, %vm522
        %v524 = vsel %vm523, %v516, %v520
        %v525 = vand.u32 2147483647, %v515
        %vm526 = vcmp.eq.f32.partialorder %v525, 8.507059e+37
        %v527 = vand.u32 %v515, 2147483648
        %v528 = vor.u32 1.1754944e-38, %v527
        %v529 = vsel %vm526, %v528, %v524
        %v530 = vmul.f32 1.0, %v529
        %v531 = vadd.f32 %v381, %v489
        %v532 = vxor.u32 %v531, 2147483648
        %v533 = vmul.f32 %v532, 1.442695
        %v534 = vpow.pop %v533
        %v535 = vadd.f32 %v534, 1.0
        %v536 = vrcp.pop %v535
        %v537 = vmul.f32 %v535, %v536
        %v538 = vsub.f32 1.0, %v537
        %v539 = vmul.f32 %v536, %v538
        %v540 = vadd.f32 %v536, %v539
        %vm541 = vweird.f32 %v535
        %vm542 = vweird.f32 %v536
        %vm543 = vmor %vm541, %vm542
        %v544 = vsel %vm543, %v536, %v540
        %v545 = vand.u32 2147483647, %v535
        %vm546 = vcmp.eq.f32.partialorder %v545, 8.507059e+37
        %v547 = vand.u32 %v535, 2147483648
        %v548 = vor.u32 1.1754944e-38, %v547
        %v549 = vsel %vm546, %v548, %v544
        %v550 = vmul.f32 1.0, %v549
        %v551 = vld [vmem:[%s5] sm:$0x1]
        %v553 = vperm.slane %v551, 0
        %v555 = vadd.f32 %v509, %v553
        %v556 = vmul.f32 %v530, %v555
        %v557 = vadd.f32 %v401, %v556
        %v558 = vtanh.pop %v557
        %v559 = vsub.f32 %v324, %v558
        %v560 = vmul.f32 %v550, %v559
        %v561 = vadd.f32 %v558, %v560
        %562 = vst [vmem:[#allocation2] sm:$0xf] %v561
        %563 = vst [vmem:[%s316] sm:$0xf] %v561
        %s564 = sand.u32 %s164, 1
        %s565 = scalar_lea.sflag [#allocation5], %s564
        %s566 = sand.u32 %s164, 1
        %s567 = smul.addr %s566, 4
        %s568 = scalar_lea.vmem [#allocation11], %s567
        // Predicated region
        $region65: #{tpu_custom_call.1} parent=43 // pred_check
          %p569 = pneg %p174
        $region66: #{tpu_custom_call.1} parent=43 // pred_check_branch
          %571 = sbr.rel (%p569) target = $region68
        $region67: #{tpu_custom_call.1} parent=43 // pred_region
          %573 = vsyncadd %s565, 0
          %s574 = smul.addr %s25, 4
          %s575 = scalar_lea.hbm %s6, %s574
          %s577 = sshll.u32 %s568, 4
          %s578 = int_to_ptr.vmem [resolvable:$true] %s577
          %s579 = sshll.u32 %s575, 4
          %s580 = int_to_ptr.hbm [resolvable:$true] %s579
          %582 = dma.vmem_to_hbm [thread:$0]  %s578, 64, %s580, %s565
        $region68: #{tpu_custom_call.1} parent=43 // pred_fallthru
          _
      $region44: #{tpu_custom_call.1} parent=5 // pred_fallthru
        _
      %p583 = scmp.le.s32.totalorder 2, %s20
      // Predicated region
      $region69: #{tpu_custom_call.1} parent=5 // pred_check
        %p584 = pneg %p583
      $region70: #{tpu_custom_call.1} parent=5 // pred_check_branch
        %586 = sbr.rel (%p584) target = $region72
      $region71: #{tpu_custom_call.1} parent=5 // pred_region
        %s587 = ssub.s32 %s20, 2
        // Predicated region
        $region73: #{tpu_custom_call.1} parent=71 // pred_check
          %p588 = pneg %p180
        $region74: #{tpu_custom_call.1} parent=71 // pred_check_branch
          %590 = sbr.rel (%p588) target = $region76
        $region75: #{tpu_custom_call.1} parent=71 // pred_region
          %s591 = sand.u32 %s165, 1
          %s592 = scalar_lea.sflag [#allocation5], %s591
          %s593 = sand.u32 %s165, 1
          %s594 = smul.addr %s593, 4
          %s595 = scalar_lea.vmem [#allocation11], %s594
          %597 = dma.done %s592, 64
        $region76: #{tpu_custom_call.1} parent=71 // pred_fallthru
          _
      $region72: #{tpu_custom_call.1} parent=5 // pred_fallthru
        _
    $region6: #{tpu_custom_call.1} parent=1 // loop_footer
      %s24 = sadd.s32 1, %s20
    $region7: #{tpu_custom_call.1} parent=1 // loop_footer_branch
      %19 = sbr.rel target = $region3
    $region8: #{tpu_custom_call.1} parent=1 // loop_exit
      _
    %598 = vsyncpa [#allocation4], 1
    %s599 = scalar_lea.sflag [#allocation4], 1
    %600 = vsyncpa %s599, 1
    %601 = vsyncpa [#allocation7], 1
    %602 = vsyncpa [#allocation10], 1
    %603 = vsyncpa [#allocation5], 1
    %s604 = scalar_lea.sflag [#allocation5], 1
    %605 = vsyncpa %s604, 1

</llo_original>
